<compile_context>
chip_gen: v5e
topology: v5e:2x2
jax: 0.10.0
libtpu: 0.0.40
codegen_flags: <defaults>
</compile_context>

<pallas_src>
import functools

import jax
import jax.numpy as jnp
from jax.experimental import pallas as pl
from jax.experimental.pallas import tpu as pltpu


def _round_up(a: int, b: int) -> int:
    return (a + b - 1) // b * b


def ffn_kernel(*refs, is_gated: bool):
    if is_gated:
        (x_ref, w1_ref, b1_ref, wv_ref, bg_ref,
         w2_ref, b2_ref, o_ref, acc_ref) = refs
    else:
        x_ref, w1_ref, b1_ref, w2_ref, b2_ref, o_ref, acc_ref = refs
        wv_ref = bg_ref = None

    h_idx = pl.program_id(1)

    @pl.when(h_idx == 0)
    def _init():
        acc_ref[...] = jnp.zeros_like(acc_ref)

    # g = relu(x @ W1[:, h_tile] + b1[h_tile])   (f32 accumulation on the MXU)
    x = x_ref[...]
    g = jnp.dot(x, w1_ref[...], preferred_element_type=jnp.float32) + b1_ref[...]
    g = jnp.maximum(g, 0.0)  # activation = nn.ReLU()

    if is_gated:
        v = jnp.dot(x, wv_ref[...], preferred_element_type=jnp.float32) + bg_ref[...]
        g = g * v

    # TODO(synk): dropout is identity here (inference mode); training parity
    # would need pltpu.prng_seed / pltpu.prng_random_bits masking.

    # Accumulate the partial second matmul: acc += g @ W2[h_tile, :].
    # Only the MXU operand is cast to the input dtype; accumulation stays f32.
    acc_ref[...] += jnp.dot(g.astype(x.dtype), w2_ref[...],
                            preferred_element_type=jnp.float32)

    @pl.when(h_idx == pl.num_programs(1) - 1)
    def _finalize():
        o_ref[...] = (acc_ref[...] + b2_ref[...]).astype(o_ref.dtype)


def feed_forward(x, w1, b1, w2, b2, wv=None, bg=None, *,
                 tm: int = 256, th: int = 512,
                 vmem_budget_bytes: int = 28 * 1024 * 1024):
    """FFN forward pass.

    x: (B, S, D); w1: (D, H) = layer1.weight.T; b1: (H,) or None;
    w2: (H, D) = layer2.weight.T; b2: (D,) or None;
    wv: (D, H) = linear_v.weight.T or None (None => is_gated=False); bg: (H,) or None.
    """
    B, S, D = x.shape
    M = B * S
    H = w1.shape[1]
    dtype = x.dtype
    itemsize = jnp.dtype(dtype).itemsize
    is_gated = wv is not None

    # --- Tiling ----------------------------------------------------------------
    # Sublane packing: 16 rows per vreg for bf16, 8 for f32.
    pack = 16 if dtype == jnp.bfloat16 else 8
    tm = max(pack, min(tm, _round_up(M, pack)))
    tm = _round_up(tm, pack)
    M_pad = _round_up(M, tm)

    # Lane-dense padding of the model and hidden dims (zero padding is a no-op
    # for the result rows/cols we keep).
    D_pad = _round_up(D, 128)
    H_pad = _round_up(H, 128)

    th = max(128, min(_round_up(th, 128), H_pad))
    n_mm = 3 if is_gated else 2          # matmuls per row tile
    n_w = n_mm                           # weight tensors streamed per h step

    def _vmem_bytes(th_):
        w = 2 * n_w * D_pad * th_ * itemsize              # W1 / W2 (/ Wv), dbl-buffered
        xb = 2 * tm * D_pad * itemsize                    # x tile
        ob = 2 * tm * D_pad * itemsize                    # out tile
        bb = 2 * ((n_w - 1) * th_ + D_pad) * itemsize     # b1 (/ bg), b2
        acc = tm * D_pad * 4                              # f32 accumulator
        return w + xb + ob + bb + acc

    # If the whole hidden dim fits the budget, take it in one step: weights are
    # then DMA'd once and reused across every M tile (their block index never
    # changes).  Otherwise stream H in th-wide chunks.
    if _vmem_bytes(H_pad) <= vmem_budget_bytes:
        th = H_pad
    H_pad = _round_up(H_pad, th)

    # --- Zero-pad ragged dims ---------------------------------------------------
    xf = x.reshape(M, D)
    xf = jnp.pad(xf, ((0, M_pad - M), (0, D_pad - D)))
    w1p = jnp.pad(w1, ((0, D_pad - D), (0, H_pad - H)))
    w2p = jnp.pad(w2, ((0, H_pad - H), (0, D_pad - D)))
    b1v = b1 if b1 is not None else jnp.zeros((H,), dtype)
    b2v = b2 if b2 is not None else jnp.zeros((D,), dtype)
    b1p = jnp.pad(b1v, (0, H_pad - H)).reshape(1, H_pad)
    b2p = jnp.pad(b2v, (0, D_pad - D)).reshape(1, D_pad)
    if is_gated:
        wvp = jnp.pad(wv, ((0, D_pad - D), (0, H_pad - H)))
        bgv = bg if bg is not None else jnp.zeros((H,), dtype)
        bgp = jnp.pad(bgv, (0, H_pad - H)).reshape(1, H_pad)

    grid = (M_pad // tm, H_pad // th)

    # --- BlockSpecs ---------------------------------------------------------------
    in_specs = [
        pl.BlockSpec((tm, D_pad), lambda i, h: (i, 0)),    # x row tile
        pl.BlockSpec((D_pad, th), lambda i, h: (0, h)),    # W1 hidden tile
        pl.BlockSpec((1, th), lambda i, h: (0, h)),        # b1 hidden tile
    ]
    operands = [xf, w1p, b1p]
    if is_gated:
        in_specs += [
            pl.BlockSpec((D_pad, th), lambda i, h: (0, h)),  # Wv hidden tile
            pl.BlockSpec((1, th), lambda i, h: (0, h)),      # bg hidden tile
        ]
        operands += [wvp, bgp]
    in_specs += [
        pl.BlockSpec((th, D_pad), lambda i, h: (h, 0)),    # W2 hidden tile
        pl.BlockSpec((1, D_pad), lambda i, h: (0, 0)),     # b2
    ]
    operands += [w2p, b2p]

    cost = pl.CostEstimate(
        flops=2 * n_mm * M * D * H,
        transcendentals=0,
        bytes_accessed=(M * D + n_mm * D * H + (n_mm - 1) * H + D + M * D) * itemsize,
    )

    out = pl.pallas_call(
        functools.partial(ffn_kernel, is_gated=is_gated),
        out_shape=jax.ShapeDtypeStruct((M_pad, D_pad), dtype),
        grid_spec=pltpu.PrefetchScalarGridSpec(
            num_scalar_prefetch=0,
            grid=grid,
            in_specs=in_specs,
            out_specs=pl.BlockSpec((tm, D_pad), lambda i, h: (i, 0)),
            scratch_shapes=[pltpu.VMEM((tm, D_pad), jnp.float32)],  # f32 accumulator
        ),
        compiler_params=pltpu.CompilerParams(
            dimension_semantics=("parallel", "arbitrary"),
            vmem_limit_bytes=48 * 1024 * 1024,  # fits v7x (64 MiB phys) with headroom
        ),
        cost_estimate=cost,
    )(*operands)

    return out[:M, :D].reshape(B, S, D)


def init_params(key, d_model, hidden, dtype=jnp.float32, gated=False):
    # Mimic nn.Linear default init: U(-1/sqrt(fan_in), 1/sqrt(fan_in)).
    k1, k2, k3, k4, k5, k6 = jax.random.split(key, 6)
    bound1 = 1.0 / (d_model ** 0.5)
    bound2 = 1.0 / (hidden ** 0.5)
    w1 = jax.random.uniform(k1, (d_model, hidden), dtype, -bound1, bound1)  # layer1.weight.T
    b1 = jax.random.uniform(k2, (hidden,), dtype, -bound1, bound1)
    w2 = jax.random.uniform(k3, (hidden, d_model), dtype, -bound2, bound2)  # layer2.weight.T
    b2 = jax.random.uniform(k4, (d_model,), dtype, -bound2, bound2)
    if not gated:
        return w1, b1, w2, b2
    wv = jax.random.uniform(k5, (d_model, hidden), dtype, -bound1, bound1)  # linear_v.weight.T
    bg = jax.random.uniform(k6, (hidden,), dtype, -bound1, bound1)
    return w1, b1, w2, b2, wv, bg


def _ref(x, w1, b1, w2, b2, wv=None, bg=None):
    g = jnp.maximum(x @ w1 + b1, 0.0)
    if wv is not None:
        g = g * (x @ wv + bg)
    return g @ w2 + b2


if __name__ == "__main__":
    # --- Test 1: small f32 (single grid block; init/finalize both fire) ---
    batch, seq, d_model, hidden = 2, 8, 32, 64
    key = jax.random.PRNGKey(0)
    kx, kp = jax.random.split(key)
    x = jax.random.normal(kx, (batch, seq, d_model), jnp.float32)
    w1, b1, w2, b2 = init_params(kp, d_model, hidden)

    out = jax.block_until_ready(feed_forward(x, w1, b1, w2, b2))
    ref = _ref(x, w1, b1, w2, b2)
    assert out.shape == (batch, seq, d_model)
    assert jnp.allclose(out, ref, atol=1e-5, rtol=1e-5)

    # --- Test 2: ragged M + multiple M blocks + forced hidden streaming ---
    batch2, seq2, d_model2, hidden2 = 2, 100, 128, 512   # M=200 -> padded to 256
    kx2, kp2 = jax.random.split(jax.random.PRNGKey(1))
    x2 = jax.random.normal(kx2, (batch2, seq2, d_model2), jnp.float32)
    p2 = init_params(kp2, d_model2, hidden2)
    out2 = jax.block_until_ready(
        feed_forward(x2, *p2, tm=128, th=256, vmem_budget_bytes=0))  # force streaming
    ref2 = _ref(x2, *p2)
    assert out2.shape == (batch2, seq2, d_model2)
    assert jnp.allclose(out2, ref2, atol=1e-3, rtol=1e-3)

    # --- Test 3: bf16 operands (f32 MXU accumulation), loose tolerance ---
    xb = x.astype(jnp.bfloat16)
    pb = tuple(p.astype(jnp.bfloat16) for p in (w1, b1, w2, b2))
    out_b = jax.block_until_ready(feed_forward(xb, *pb))
    assert out_b.dtype == jnp.bfloat16
    assert jnp.allclose(out_b.astype(jnp.float32), ref, atol=1e-1, rtol=1e-1)

    # --- Test 4: gated variant (is_gated=True) ---
    batch3, seq3, d_model3, hidden3 = 2, 8, 64, 96
    kx3, kp3 = jax.random.split(jax.random.PRNGKey(2))
    x3 = jax.random.normal(kx3, (batch3, seq3, d_model3), jnp.float32)
    w1g, b1g, w2g, b2g, wvg, bgg = init_params(kp3, d_model3, hidden3, gated=True)
    out3 = jax.block_until_ready(feed_forward(x3, w1g, b1g, w2g, b2g, wvg, bgg))
    ref3 = _ref(x3, w1g, b1g, w2g, b2g, wvg, bgg)
    assert out3.shape == (batch3, seq3, d_model3)
    assert jnp.allclose(out3, ref3, atol=1e-4, rtol=1e-4)

    print("KERNEL_OK")
</pallas_src>

<mosaic_0001>
module attributes {stable_mosaic.version = 11 : i64} {
  func.func @ffn_kernel(%arg0: i32, %arg1: i32, %arg2: memref<16x128xf32, #tpu.memory_space<vmem>>, %arg3: memref<128x128xf32, #tpu.memory_space<vmem>>, %arg4: memref<1x128xf32, #tpu.memory_space<vmem>>, %arg5: memref<128x128xf32, #tpu.memory_space<vmem>>, %arg6: memref<1x128xf32, #tpu.memory_space<vmem>>, %arg7: memref<16x128xf32, #tpu.memory_space<vmem>>, %arg8: memref<16x128xf32, #tpu.memory_space<vmem>>) attributes {dimension_semantics = [#tpu.dimension_semantics<parallel>, #tpu.dimension_semantics<arbitrary>], iteration_bounds = array<i64: 1, 1>, scalar_prefetch = 0 : i64, scratch_operands = 1 : i64, tpu.core_type = #tpu.core_type<tc>, window_params = [{transform_indices = @transform_0, window_bounds = array<i64: 16, 128>}, {transform_indices = @transform_1, window_bounds = array<i64: 128, 128>}, {transform_indices = @transform_2, window_bounds = array<i64: 1, 128>}, {transform_indices = @transform_3, window_bounds = array<i64: 128, 128>}, {pipeline_mode = #tpu.pipeline_mode<synchronous>, transform_indices = @transform_4, window_bounds = array<i64: 1, 128>}, {transform_indices = @transform_5, window_bounds = array<i64: 16, 128>}]} {
    %c0_i32 = arith.constant 0 : i32
    %0 = arith.cmpi eq, %arg1, %c0_i32 : i32
    %1 = arith.extui %0 : i1 to i32
    %c0_i32_0 = arith.constant 0 : i32
    %2 = arith.cmpi ne, %1, %c0_i32_0 : i32
    scf.if %2 {
      %cst_16 = arith.constant 0.000000e+00 : f32
      %19 = vector.broadcast %cst_16 : f32 to vector<16x128xf32>
      %c0_17 = arith.constant 0 : index
      %c0_18 = arith.constant 0 : index
      %20 = vector.load %arg8[%c0_17, %c0_18] : memref<16x128xf32, #tpu.memory_space<vmem>>, vector<16x128xf32>
      tpu.vector_store %arg8[%c0_17, %c0_18], %19 {strides = array<i32>} : memref<16x128xf32, #tpu.memory_space<vmem>>, vector<16x128xf32>,
    } else {
    }
    %c0 = arith.constant 0 : index
    %c0_1 = arith.constant 0 : index
    %3 = vector.load %arg2[%c0, %c0_1] : memref<16x128xf32, #tpu.memory_space<vmem>>, vector<16x128xf32>
    %c0_2 = arith.constant 0 : index
    %c0_3 = arith.constant 0 : index
    %4 = vector.load %arg3[%c0_2, %c0_3] : memref<128x128xf32, #tpu.memory_space<vmem>>, vector<128x128xf32>
    %cst = arith.constant dense<0.000000e+00> : vector<16x128xf32>
    %5 = tpu.matmul %3, %4, %cst {dimension_numbers = #tpu.dot_dimension_numbers<[1], [0], [0], [1], [0, 0, 1, 1], [], []>} : vector<16x128xf32>, vector<128x128xf32>, vector<16x128xf32> -> vector<16x128xf32>
    %c0_4 = arith.constant 0 : index
    %c0_5 = arith.constant 0 : index
    %6 = vector.load %arg4[%c0_4, %c0_5] : memref<1x128xf32, #tpu.memory_space<vmem>>, vector<1x128xf32>
    %7 = vector.broadcast %6 : vector<1x128xf32> to vector<16x128xf32>
    %8 = arith.addf %5, %7 : vector<16x128xf32>
    %cst_6 = arith.constant 0.000000e+00 : f32
    %9 = vector.broadcast %cst_6 : f32 to vector<16x128xf32>
    %10 = arith.maximumf %8, %9 : vector<16x128xf32>
    %c0_7 = arith.constant 0 : index
    %c0_8 = arith.constant 0 : index
    %11 = vector.load %arg8[%c0_7, %c0_8] : memref<16x128xf32, #tpu.memory_space<vmem>>, vector<16x128xf32>
    %c0_9 = arith.constant 0 : index
    %c0_10 = arith.constant 0 : index
    %12 = vector.load %arg5[%c0_9, %c0_10] : memref<128x128xf32, #tpu.memory_space<vmem>>, vector<128x128xf32>
    %cst_11 = arith.constant dense<0.000000e+00> : vector<16x128xf32>
    %13 = tpu.matmul %10, %12, %cst_11 {dimension_numbers = #tpu.dot_dimension_numbers<[1], [0], [0], [1], [0, 0, 1, 1], [], []>} : vector<16x128xf32>, vector<128x128xf32>, vector<16x128xf32> -> vector<16x128xf32>
    %14 = arith.addf %11, %13 : vector<16x128xf32>
    %c0_12 = arith.constant 0 : index
    %c0_13 = arith.constant 0 : index
    %15 = vector.load %arg8[%c0_12, %c0_13] : memref<16x128xf32, #tpu.memory_space<vmem>>, vector<16x128xf32>
    tpu.vector_store %arg8[%c0_12, %c0_13], %14 {strides = array<i32>} : memref<16x128xf32, #tpu.memory_space<vmem>>, vector<16x128xf32>,
    %c0_i32_14 = arith.constant 0 : i32
    %16 = arith.cmpi eq, %arg1, %c0_i32_14 : i32
    %17 = arith.extui %16 : i1 to i32
    %c0_i32_15 = arith.constant 0 : i32
    %18 = arith.cmpi ne, %17, %c0_i32_15 : i32
    scf.if %18 {
      %c0_16 = arith.constant 0 : index
      %c0_17 = arith.constant 0 : index
      %19 = vector.load %arg8[%c0_16, %c0_17] : memref<16x128xf32, #tpu.memory_space<vmem>>, vector<16x128xf32>
      %c0_18 = arith.constant 0 : index
      %c0_19 = arith.constant 0 : index
      %20 = vector.load %arg6[%c0_18, %c0_19] : memref<1x128xf32, #tpu.memory_space<vmem>>, vector<1x128xf32>
      %21 = vector.broadcast %20 : vector<1x128xf32> to vector<16x128xf32>
      %22 = arith.addf %19, %21 : vector<16x128xf32>
      %c0_20 = arith.constant 0 : index
      %c0_21 = arith.constant 0 : index
      %23 = vector.load %arg7[%c0_20, %c0_21] : memref<16x128xf32, #tpu.memory_space<vmem>>, vector<16x128xf32>
      tpu.vector_store %arg7[%c0_20, %c0_21], %22 {strides = array<i32>} : memref<16x128xf32, #tpu.memory_space<vmem>>, vector<16x128xf32>,
    } else {
    }
    return
  }
  func.func @transform_0(%arg0: i32, %arg1: i32) -> (i32, i32) {
    %c0_i32 = arith.constant 0 : i32
    %c0_i32_0 = arith.constant 0 : i32
    return %arg0, %c0_i32 : i32, i32
  }
  func.func @transform_1(%arg0: i32, %arg1: i32) -> (i32, i32) {
    %c0_i32 = arith.constant 0 : i32
    %c0_i32_0 = arith.constant 0 : i32
    return %c0_i32, %arg1 : i32, i32
  }
  func.func @transform_2(%arg0: i32, %arg1: i32) -> (i32, i32) {
    %c0_i32 = arith.constant 0 : i32
    %c0_i32_0 = arith.constant 0 : i32
    return %c0_i32, %arg1 : i32, i32
  }
  func.func @transform_3(%arg0: i32, %arg1: i32) -> (i32, i32) {
    %c0_i32 = arith.constant 0 : i32
    %c0_i32_0 = arith.constant 0 : i32
    return %arg1, %c0_i32 : i32, i32
  }
  func.func @transform_4(%arg0: i32, %arg1: i32) -> (i32, i32) {
    %c0_i32 = arith.constant 0 : i32
    %c0_i32_0 = arith.constant 0 : i32
    %c0_i32_1 = arith.constant 0 : i32
    return %c0_i32, %c0_i32_0 : i32, i32
  }
  func.func @transform_5(%arg0: i32, %arg1: i32) -> (i32, i32) {
    %c0_i32 = arith.constant 0 : i32
    %c0_i32_0 = arith.constant 0 : i32
    return %arg0, %c0_i32 : i32, i32
  }
}

</mosaic_0001>

<llo_original>
// kernel: tpu_custom_call.1
$region0: #{tpu_custom_call.1}
  #allocation0 [shape = 'u32[]', space=smem, size = 0x4, offset = 0x4, fixed_abs, tag = 'smem constant byte address 0x4 - core index']
  #allocation1 [shape = 'u32[72,128]{1,0:T(1,128)}', space=vmem, size = 0x9000, scoped, tag = 'internal scratch']
  #allocation2 [shape = 'f32[16,128]{1,0:T(8,128)}', space=vmem, size = 0x2000, scoped, tag = 'scratch operand']
  %s0 = inlined_call_operand.hbm [shape: f32[16,128], index: 0, kind: input, shape index: {}]
  %s1 = inlined_call_operand.hbm [shape: f32[128,128], index: 1, kind: input, shape index: {}]
  %s2 = inlined_call_operand.vmem [shape: f32[1,128], index: 2, kind: input, shape index: {}]
  %s3 = inlined_call_operand.hbm [shape: f32[128,128], index: 3, kind: input, shape index: {}]
  %s4 = inlined_call_operand.vmem [shape: f32[1,128], index: 4, kind: input, shape index: {}]
  %s5 = inlined_call_operand.hbm [shape: f32[16,128], index: 5, kind: output, shape index: {}]
  %s6 = sld [smem:[#allocation0]]
  $region50: #{tpu_custom_call.1} parent=0
    _
  %s8 = ssub.s32 1, %s6
  %s9 = scalar_select 0, %s8, %s6
  $region1: #{tpu_custom_call.1} parent=0
    #allocation3 [shape = 'u8[8192]{0}', space=vmem, size = 0x2000, scoped, tag = 'input window, operand 0, single buffered']
    #allocation4 [shape = 's32[1]{0}', space=sflag, size = 0x4, scoped, tag = 'scoped memory for tpu_custom_call.1']
    #allocation5 [shape = 's32[1]{0}', space=sflag, size = 0x4, scoped, tag = 'scoped memory for tpu_custom_call.1']
    #allocation6 [shape = 'u8[65536]{0}', space=vmem, size = 0x10000, scoped, tag = 'input window, operand 1, single buffered']
    #allocation7 [shape = 's32[1]{0}', space=sflag, size = 0x4, scoped, tag = 'scoped memory for tpu_custom_call.1']
    #allocation8 [shape = 'u8[65536]{0}', space=vmem, size = 0x10000, scoped, tag = 'input window, operand 3, single buffered']
    #allocation9 [shape = 'u8[8192]{0}', space=vmem, size = 0x2000, scoped, tag = 'output window, operand 0, single buffered']
    %10 = vsyncpa [#allocation4], 0
    %11 = vsyncpa [#allocation7], 0
    %12 = vsyncpa [#allocation5], 0
    // Predicated region
    $region2: #{tpu_custom_call.1} parent=1 // pred_check
      _
    $region3: #{tpu_custom_call.1} parent=1 // pred_check_branch
      %14 = sbr.rel (0) target = $region5
    $region4: #{tpu_custom_call.1} parent=1 // pred_region
      %16 = vsyncadd [#allocation4], 0
      %s17 = sshll.u32 %s0, 4
      %s18 = int_to_ptr.hbm [resolvable:$true] %s17
      %s19 = sshll.u32 [#allocation3], 4
      %s20 = int_to_ptr.vmem [resolvable:$true] %s19
      %25 = dma.hbm_to_vmem [thread:$0]  %s18, 256, %s20, [#allocation4], 128, 128, 8
    $region5: #{tpu_custom_call.1} parent=1 // pred_fallthru
      _
    // Predicated region
    $region6: #{tpu_custom_call.1} parent=1 // pred_check
      _
    $region7: #{tpu_custom_call.1} parent=1 // pred_check_branch
      %27 = sbr.rel (0) target = $region9
    $region8: #{tpu_custom_call.1} parent=1 // pred_region
      %29 = vsyncadd [#allocation7], 0
      %s30 = sshll.u32 %s1, 4
      %s31 = int_to_ptr.hbm [resolvable:$true] %s30
      %s32 = sshll.u32 [#allocation6], 4
      %s33 = int_to_ptr.vmem [resolvable:$true] %s32
      %38 = dma.hbm_to_vmem [thread:$0]  %s31, 2048, %s33, [#allocation7], 128, 128, 8
    $region9: #{tpu_custom_call.1} parent=1 // pred_fallthru
      _
    // Predicated region
    $region10: #{tpu_custom_call.1} parent=1 // pred_check
      _
    $region11: #{tpu_custom_call.1} parent=1 // pred_check_branch
      %40 = sbr.rel (0) target = $region13
    $region12: #{tpu_custom_call.1} parent=1 // pred_region
      _
    $region13: #{tpu_custom_call.1} parent=1 // pred_fallthru
      _
    // Predicated region
    $region14: #{tpu_custom_call.1} parent=1 // pred_check
      _
    $region15: #{tpu_custom_call.1} parent=1 // pred_check_branch
      %42 = sbr.rel (0) target = $region17
    $region16: #{tpu_custom_call.1} parent=1 // pred_region
      %44 = vsyncadd [#allocation7], 0
      %s45 = sshll.u32 %s3, 4
      %s46 = int_to_ptr.hbm [resolvable:$true] %s45
      %s47 = sshll.u32 [#allocation8], 4
      %s48 = int_to_ptr.vmem [resolvable:$true] %s47
      %53 = dma.hbm_to_vmem [thread:$0]  %s46, 2048, %s48, [#allocation7], 128, 128, 8
    $region17: #{tpu_custom_call.1} parent=1 // pred_fallthru
      _
    // Predicated region
    $region18: #{tpu_custom_call.1} parent=1 // pred_check
      _
    $region19: #{tpu_custom_call.1} parent=1 // pred_check_branch
      %55 = sbr.rel (0) target = $region21
    $region20: #{tpu_custom_call.1} parent=1 // pred_region
      _
    $region21: #{tpu_custom_call.1} parent=1 // pred_fallthru
      _
    // Predicated region
    $region22: #{tpu_custom_call.1} parent=1 // pred_check
      _
    $region23: #{tpu_custom_call.1} parent=1 // pred_check_branch
      %57 = sbr.rel (0) target = $region25
    $region24: #{tpu_custom_call.1} parent=1 // pred_region
      %59 = dma.done [#allocation4], 256
    $region25: #{tpu_custom_call.1} parent=1 // pred_fallthru
      _
    // Predicated region
    $region26: #{tpu_custom_call.1} parent=1 // pred_check
      _
    $region27: #{tpu_custom_call.1} parent=1 // pred_check_branch
      %61 = sbr.rel (0) target = $region29
    $region28: #{tpu_custom_call.1} parent=1 // pred_region
      %63 = dma.done [#allocation7], 2048
    $region29: #{tpu_custom_call.1} parent=1 // pred_fallthru
      _
    // Predicated region
    $region30: #{tpu_custom_call.1} parent=1 // pred_check
      _
    $region31: #{tpu_custom_call.1} parent=1 // pred_check_branch
      %65 = sbr.rel (0) target = $region33
    $region32: #{tpu_custom_call.1} parent=1 // pred_region
      %67 = dma.done [#allocation7], 2048
    $region33: #{tpu_custom_call.1} parent=1 // pred_fallthru
      _
    %p68 = scmp.eq.s32.totalorder 0, 0
    // Predicated region
    $region34: #{tpu_custom_call.1} parent=1 // pred_check
      %p69 = pneg %p68
    $region35: #{tpu_custom_call.1} parent=1 // pred_check_branch
      %71 = sbr.rel (%p69) target = $region37
    $region36: #{tpu_custom_call.1} parent=1 // pred_region
      %72 = vst [vmem:[#allocation2] sm:$0xff] 0.0
      %73 = vst [vmem:[#allocation2 + $0x8] sm:$0xff] 0.0
    $region37: #{tpu_custom_call.1} parent=1 // pred_fallthru
      _
    %v74 = vld [vmem:[#allocation3] sm:$0xff]
    %v75 = vld [vmem:[#allocation3 + $0x8] sm:$0xff]
    %v76 = vld [vmem:[#allocation6] sm:$0xff]
    %v77 = vld [vmem:[#allocation6 + $0x8] sm:$0xff]
    %v78 = vld [vmem:[#allocation6 + $0x10] sm:$0xff]
    %v79 = vld [vmem:[#allocation6 + $0x18] sm:$0xff]
    %v80 = vld [vmem:[#allocation6 + $0x20] sm:$0xff]
    %v81 = vld [vmem:[#allocation6 + $0x28] sm:$0xff]
    %v82 = vld [vmem:[#allocation6 + $0x30] sm:$0xff]
    %v83 = vld [vmem:[#allocation6 + $0x38] sm:$0xff]
    %v84 = vld [vmem:[#allocation6 + $0x40] sm:$0xff]
    %v85 = vld [vmem:[#allocation6 + $0x48] sm:$0xff]
    %v86 = vld [vmem:[#allocation6 + $0x50] sm:$0xff]
    %v87 = vld [vmem:[#allocation6 + $0x58] sm:$0xff]
    %v88 = vld [vmem:[#allocation6 + $0x60] sm:$0xff]
    %v89 = vld [vmem:[#allocation6 + $0x68] sm:$0xff]
    %v90 = vld [vmem:[#allocation6 + $0x70] sm:$0xff]
    %v91 = vld [vmem:[#allocation6 + $0x78] sm:$0xff]
    %v92 = vld [vmem:[%s2] sm:$0x1]
    %v94 = vperm.slane %v92, 0
    %96 = vmatpush.msra.mxu0 %v91
    %97 = vmatpush.msra.mxu0 %v90
    %98 = vmatpush.msra.mxu0 %v89
    %99 = vmatpush.msra.mxu0 %v88
    %100 = vmatpush.msra.mxu0 %v87
    %101 = vmatpush.msra.mxu0 %v86
    %102 = vmatpush.msra.mxu0 %v85
    %103 = vmatpush.msra.mxu0 %v84
    %104 = vmatpush.msra.mxu0 %v83
    %105 = vmatpush.msra.mxu0 %v82
    %106 = vmatpush.msra.mxu0 %v81
    %107 = vmatpush.msra.mxu0 %v80
    %108 = vmatpush.msra.mxu0 %v79
    %109 = vmatpush.msra.mxu0 %v78
    %110 = vmatpush.msra.mxu0 %v77
    %111 = vmatpush.msra.mxu0 %v76
    %112 = vmatmul.f32.gmra.mxu0 %v74
    %v113 = vpop.f32.mrf.mxu0
    %v114 = vadd.f32 %v94, %v113
    %115 = vmatmul.f32.gmra.mxu0 %v75
    %v116 = vpop.f32.mrf.mxu0
    %v117 = vadd.f32 %v94, %v116
    %118 = vdwg.mxu0
    %v119 = vmax.f32 %v114, 0.0
    %v120 = vmax.f32 %v117, 0.0
    %v121 = vld [vmem:[#allocation2] sm:$0xff]
    %v122 = vld [vmem:[#allocation2 + $0x8] sm:$0xff]
    %v123 = vld [vmem:[#allocation8] sm:$0xff]
    %v124 = vld [vmem:[#allocation8 + $0x8] sm:$0xff]
    %v125 = vld [vmem:[#allocation8 + $0x10] sm:$0xff]
    %v126 = vld [vmem:[#allocation8 + $0x18] sm:$0xff]
    %v127 = vld [vmem:[#allocation8 + $0x20] sm:$0xff]
    %v128 = vld [vmem:[#allocation8 + $0x28] sm:$0xff]
    %v129 = vld [vmem:[#allocation8 + $0x30] sm:$0xff]
    %v130 = vld [vmem:[#allocation8 + $0x38] sm:$0xff]
    %v131 = vld [vmem:[#allocation8 + $0x40] sm:$0xff]
    %v132 = vld [vmem:[#allocation8 + $0x48] sm:$0xff]
    %v133 = vld [vmem:[#allocation8 + $0x50] sm:$0xff]
    %v134 = vld [vmem:[#allocation8 + $0x58] sm:$0xff]
    %v135 = vld [vmem:[#allocation8 + $0x60] sm:$0xff]
    %v136 = vld [vmem:[#allocation8 + $0x68] sm:$0xff]
    %v137 = vld [vmem:[#allocation8 + $0x70] sm:$0xff]
    %v138 = vld [vmem:[#allocation8 + $0x78] sm:$0xff]
    %139 = vmatpush.msra.mxu0 %v138
    %140 = vmatpush.msra.mxu0 %v137
    %141 = vmatpush.msra.mxu0 %v136
    %142 = vmatpush.msra.mxu0 %v135
    %143 = vmatpush.msra.mxu0 %v134
    %144 = vmatpush.msra.mxu0 %v133
    %145 = vmatpush.msra.mxu0 %v132
    %146 = vmatpush.msra.mxu0 %v131
    %147 = vmatpush.msra.mxu0 %v130
    %148 = vmatpush.msra.mxu0 %v129
    %149 = vmatpush.msra.mxu0 %v128
    %150 = vmatpush.msra.mxu0 %v127
    %151 = vmatpush.msra.mxu0 %v126
    %152 = vmatpush.msra.mxu0 %v125
    %153 = vmatpush.msra.mxu0 %v124
    %154 = vmatpush.msra.mxu0 %v123
    %155 = vmatmul.f32.gmra.mxu0 %v119
    %v156 = vpop.f32.mrf.mxu0
    %v157 = vadd.f32 0.0, %v156
    %158 = vmatmul.f32.gmra.mxu0 %v120
    %v159 = vpop.f32.mrf.mxu0
    %v160 = vadd.f32 0.0, %v159
    %161 = vdwg.mxu0
    %v162 = vadd.f32 %v121, %v157
    %v163 = vadd.f32 %v122, %v160
    %164 = vst [vmem:[#allocation2] sm:$0xff] %v162
    %165 = vst [vmem:[#allocation2 + $0x8] sm:$0xff] %v163
    // Predicated region
    $region38: #{tpu_custom_call.1} parent=1 // pred_check
      %p166 = pneg %p68
    $region39: #{tpu_custom_call.1} parent=1 // pred_check_branch
      %168 = sbr.rel (%p166) target = $region41
    $region40: #{tpu_custom_call.1} parent=1 // pred_region
      %v169 = vld [vmem:[#allocation2] sm:$0xff]
      %v170 = vld [vmem:[#allocation2 + $0x8] sm:$0xff]
      %v171 = vld [vmem:[%s4] sm:$0x1]
      %v173 = vperm.slane %v171, 0
      %v175 = vadd.f32 %v169, %v173
      %v176 = vadd.f32 %v170, %v173
      %177 = vst [vmem:[#allocation9] sm:$0xff] %v175
      %178 = vst [vmem:[#allocation9 + $0x8] sm:$0xff] %v176
    $region41: #{tpu_custom_call.1} parent=1 // pred_fallthru
      _
    // Predicated region
    $region42: #{tpu_custom_call.1} parent=1 // pred_check
      _
    $region43: #{tpu_custom_call.1} parent=1 // pred_check_branch
      %180 = sbr.rel (0) target = $region45
    $region44: #{tpu_custom_call.1} parent=1 // pred_region
      %182 = vsyncadd [#allocation5], 0
      %s183 = sshll.u32 [#allocation9], 4
      %s184 = int_to_ptr.vmem [resolvable:$true] %s183
      %s185 = sshll.u32 %s5, 4
      %s186 = int_to_ptr.hbm [resolvable:$true] %s185
      %191 = dma.vmem_to_hbm [thread:$0]  %s184, 256, %s186, [#allocation5], 128, 128, 8
    $region45: #{tpu_custom_call.1} parent=1 // pred_fallthru
      _
    // Predicated region
    $region46: #{tpu_custom_call.1} parent=1 // pred_check
      _
    $region47: #{tpu_custom_call.1} parent=1 // pred_check_branch
      %193 = sbr.rel (0) target = $region49
    $region48: #{tpu_custom_call.1} parent=1 // pred_region
      %195 = dma.done [#allocation5], 256
    $region49: #{tpu_custom_call.1} parent=1 // pred_fallthru
      _
    %196 = vsyncpa [#allocation4], 1
    %197 = vsyncpa [#allocation7], 1
    %198 = vsyncpa [#allocation5], 1

</llo_original>
